<compile_context>
chip_gen: v6e
topology: v6e:2x2x1
jax: 0.10.0
libtpu: 0.0.40
codegen_flags: <defaults>
</compile_context>

<pallas_src>
import functools

import jax
import jax.numpy as jnp
from jax.experimental import pallas as pl
from jax.experimental.pallas import tpu as pltpu


# ----------------------------------------------------------------------------
# Helpers
# ----------------------------------------------------------------------------
def _round_up(x, m):
    return (x + m - 1) // m * m


def _sublane_align(dtype):
    # Packed-row alignment: f32 -> 8, bf16 -> 16, int8/fp8 -> 32.
    return {4: 8, 2: 16, 1: 32}.get(jnp.dtype(dtype).itemsize, 8)


def _vmem_budget_bytes():
    # Leave ~25% headroom under physical VMEM (v7x has only 64 MiB per TC).
    try:
        return int(pltpu.get_tpu_info().vmem_capacity_bytes * 3 // 4)
    except Exception:
        return 48 << 20


# ----------------------------------------------------------------------------
# Pallas kernel:  out[tm, N] = x[tm, K] @ w[K, N] + b[1, N]
# Weight panel and bias are VMEM-resident (constant index_map); x/out streamed.
# ----------------------------------------------------------------------------
def _linear_kernel(x_ref, w_ref, b_ref, o_ref):
    acc = jnp.dot(x_ref[...], w_ref[...], preferred_element_type=jnp.float32)
    o_ref[...] = (acc + b_ref[...]).astype(o_ref.dtype)


def linear_pallas(x2d, w, b, *, tile_m=512, out_dtype=None):
    """x2d: (M, K), w: (K, N), b: (N,) -> (M, N) in out_dtype (default x2d.dtype)."""
    M, K = x2d.shape
    K2, N = w.shape
    assert K == K2
    out_dtype = jnp.dtype(out_dtype or x2d.dtype)

    xb = x2d.dtype.itemsize
    wb = w.dtype.itemsize
    ob = out_dtype.itemsize
    align = _sublane_align(x2d.dtype)

    budget = _vmem_budget_bytes()
    fixed = K * N * wb + 2 * N * 4  # resident weight panel + bias
    if fixed > budget:
        # TODO(synk): weight panel too large for VMEM residency; fall back to XLA's
        # fused dot (a K/N-tiled Pallas path is not needed for ProjectInOut shapes).
        acc = jnp.dot(x2d, w, preferred_element_type=jnp.float32)
        return (acc + b.astype(jnp.float32)).astype(out_dtype)

    tm = tile_m if M >= tile_m else _round_up(M, align)
    # Shrink tm until double-buffered x/out row tiles fit the VMEM budget.
    while tm > align and fixed + 2 * tm * (K * xb + N * ob) > budget:
        tm = max(align, _round_up(tm // 2, align))
    # Give v7x's two TensorCores at least two row tiles when there is enough work.
    if pl.cdiv(M, tm) < 2 and M > 2 * align:
        tm = _round_up(pl.cdiv(M, 2), align)

    grid = (pl.cdiv(M, tm),)
    b32 = b.astype(jnp.float32).reshape(1, N)

    vmem_needed = fixed + 2 * tm * (K * xb + N * ob)
    vmem_limit = int(min(budget, max(vmem_needed + (4 << 20), 32 << 20)))

    cost = pl.CostEstimate(
        flops=2 * M * K * N,
        transcendentals=0,
        bytes_accessed=M * K * xb + K * N * wb + N * 4 + M * N * ob,
    )

    return pl.pallas_call(
        _linear_kernel,
        out_shape=jax.ShapeDtypeStruct((M, N), out_dtype),
        grid=grid,
        in_specs=[
            pl.BlockSpec((tm, K), lambda i: (i, 0)),  # streamed activation rows
            pl.BlockSpec((K, N), lambda i: (0, 0)),   # whole weight, fetched once
            pl.BlockSpec((1, N), lambda i: (0, 0)),   # bias (f32), fetched once
        ],
        out_specs=pl.BlockSpec((tm, N), lambda i: (i, 0)),
        compiler_params=pltpu.CompilerParams(
            dimension_semantics=("parallel",),
            vmem_limit_bytes=vmem_limit),
        cost_estimate=cost,
    )(x2d, w, b32)


# Below this FLOP count the pallas_call is pure launch/DMA overhead; XLA's fused
# dot is strictly faster.
_PALLAS_MIN_FLOPS = 2 * 256 * 256 * 256


def linear(x2d, w, b, *, force_pallas=False, tile_m=512, out_dtype=None):
    """Size-gated linear.  Compute dtype is fixed by the (pre-cast) weights;
    bf16 weights are recommended on v5e/v6e/v7x.  Accumulation is always f32."""
    M, K = x2d.shape
    N = w.shape[1]
    out_dtype = jnp.dtype(out_dtype or x2d.dtype)
    if x2d.dtype != w.dtype:
        x2d = x2d.astype(w.dtype)
    if not force_pallas and 2 * M * K * N < _PALLAS_MIN_FLOPS:
        acc = jnp.dot(x2d, w, preferred_element_type=jnp.float32)
        return (acc + b.astype(jnp.float32)).astype(out_dtype)
    return linear_pallas(x2d, w, b, tile_m=tile_m, out_dtype=out_dtype)


# ----------------------------------------------------------------------------
# ProjectInOut module (functional)
# ----------------------------------------------------------------------------
def init_project_in_out_params(key, dim_in, dim_out, param_dtype=jnp.float32,
                               compute_dtype=None):
    """Init mirroring nn.Linear's U(-1/sqrt(fan_in), 1/sqrt(fan_in)).

    Weights are stored pre-cast to `compute_dtype` (done ONCE here, never per
    forward call); biases are stored f32 (added to the f32 accumulator).
    """
    if dim_in == dim_out:
        return None  # Identity projections, no params.
    cd = jnp.dtype(compute_dtype or param_dtype)
    k_wi, k_bi, k_wo, k_bo = jax.random.split(key, 4)
    bound_in = 1.0 / float(jnp.sqrt(jnp.float32(dim_in)))
    bound_out = 1.0 / float(jnp.sqrt(jnp.float32(dim_out)))
    return {
        # stored as (in_features, out_features) = PyTorch weight.T
        "w_in": jax.random.uniform(k_wi, (dim_in, dim_out), param_dtype,
                                   -bound_in, bound_in).astype(cd),
        "b_in": jax.random.uniform(k_bi, (dim_out,), param_dtype,
                                   -bound_in, bound_in).astype(jnp.float32),
        "w_out": jax.random.uniform(k_wo, (dim_out, dim_in), param_dtype,
                                    -bound_out, bound_out).astype(cd),
        "b_out": jax.random.uniform(k_bo, (dim_in,), param_dtype,
                                    -bound_out, bound_out).astype(jnp.float32),
    }


def project_in_out_forward(params, fn, x, *args, force_pallas=False,
                           tile_m=512, **kwargs):
    """Forward pass of ProjectInOut.

    x: (batch, seq, dim_in) (features last).
    fn: arbitrary JAX callable operating on (batch, seq, dim_out) tensors.
    """
    if params is None:
        # need_projection == False -> Identity / fn / Identity
        return fn(x, *args, **kwargs)

    B, S, D_in = x.shape
    D_out = params["w_in"].shape[1]
    out_dtype = x.dtype

    # project_in: Linear(dim_in -> dim_out)
    h2d = linear(x.reshape(B * S, D_in), params["w_in"], params["b_in"],
                 force_pallas=force_pallas, tile_m=tile_m, out_dtype=out_dtype)
    h = h2d.reshape(B, S, D_out)

    # fn: arbitrary wrapped module (plain JAX by design — it is user supplied).
    # TODO(synk): `fn` (the wrapped transformer block) has no single Pallas equivalent.
    h = fn(h, *args, **kwargs)

    # project_out: Linear(dim_out -> dim_in)
    y2d = linear(h.reshape(B * S, D_out), params["w_out"], params["b_out"],
                 force_pallas=force_pallas, tile_m=tile_m, out_dtype=out_dtype)
    return y2d.reshape(B, S, D_in)


# ----------------------------------------------------------------------------
# Demo / correctness check
# ----------------------------------------------------------------------------
if __name__ == "__main__":
    key = jax.random.PRNGKey(0)
    k_param, k_x = jax.random.split(key)

    batch, seq = 2, 8
    dim_in, dim_out = 32, 64

    params = init_project_in_out_params(k_param, dim_in, dim_out)
    x = jax.random.normal(k_x, (batch, seq, dim_in), jnp.float32)

    # Example wrapped fn (the real module wraps a transformer block; any callable works).
    fn = jax.nn.gelu

    # force_pallas=True: at these demo shapes the size gate would otherwise (correctly)
    # pick XLA's fused dot; forcing ensures the Pallas kernel itself is exercised.
    fwd = jax.jit(functools.partial(project_in_out_forward, params, fn,
                                    force_pallas=True))
    y = fwd(x)
    jax.block_until_ready(y)

    # Reference in plain JAX (same math).
    h_ref = x @ params["w_in"] + params["b_in"]
    h_ref = fn(h_ref)
    y_ref = h_ref @ params["w_out"] + params["b_out"]
    assert y.shape == (batch, seq, dim_in)
    assert jnp.allclose(y, y_ref, atol=1e-4, rtol=1e-4)

    # bf16 compute path (weights pre-cast once at init; f32 accumulation in-kernel).
    params_bf = init_project_in_out_params(k_param, dim_in, dim_out,
                                           compute_dtype=jnp.bfloat16)
    fwd_bf = jax.jit(functools.partial(project_in_out_forward, params_bf, fn,
                                       force_pallas=True))
    y_bf = fwd_bf(x)
    jax.block_until_ready(y_bf)
    h_bf_ref = x @ params_bf["w_in"].astype(jnp.float32) + params_bf["b_in"]
    h_bf_ref = fn(h_bf_ref)
    y_bf_ref = h_bf_ref @ params_bf["w_out"].astype(jnp.float32) + params_bf["b_out"]
    assert jnp.allclose(y_bf, y_bf_ref, atol=1e-1, rtol=1e-1)

    # Identity path (dim_in == dim_out) sanity check.
    params_id = init_project_in_out_params(k_param, dim_in, dim_in)
    y_id = project_in_out_forward(params_id, fn, x)
    assert jnp.allclose(y_id, fn(x), atol=1e-6)

    print("KERNEL_OK")
</pallas_src>

<mosaic_0001>
module attributes {stable_mosaic.version = 11 : i64} {
  func.func @_linear_kernel(%arg0: i32, %arg1: memref<16x64xf32, #tpu.memory_space<vmem>>, %arg2: memref<64x32xf32, #tpu.memory_space<vmem>>, %arg3: memref<1x32xf32, #tpu.memory_space<vmem>>, %arg4: memref<16x32xf32, #tpu.memory_space<vmem>>) attributes {dimension_semantics = [#tpu.dimension_semantics<parallel>], iteration_bounds = array<i64: 1>, scalar_prefetch = 0 : i64, scratch_operands = 0 : i64, tpu.core_type = #tpu.core_type<tc>, window_params = [{transform_indices = @transform_0, window_bounds = array<i64: 16, 64>}, {pipeline_mode = #tpu.pipeline_mode<synchronous>, transform_indices = @transform_1, window_bounds = array<i64: 64, 32>}, {pipeline_mode = #tpu.pipeline_mode<synchronous>, transform_indices = @transform_2, window_bounds = array<i64: 1, 32>}, {transform_indices = @transform_3, window_bounds = array<i64: 16, 32>}]} {
    %c0 = arith.constant 0 : index
    %c0_0 = arith.constant 0 : index
    %0 = vector.load %arg1[%c0, %c0_0] : memref<16x64xf32, #tpu.memory_space<vmem>>, vector<16x64xf32>
    %c0_1 = arith.constant 0 : index
    %c0_2 = arith.constant 0 : index
    %1 = vector.load %arg2[%c0_1, %c0_2] : memref<64x32xf32, #tpu.memory_space<vmem>>, vector<64x32xf32>
    %cst = arith.constant dense<0.000000e+00> : vector<16x32xf32>
    %2 = tpu.matmul %0, %1, %cst {dimension_numbers = #tpu.dot_dimension_numbers<[1], [0], [0], [1], [0, 0, 1, 1], [], []>} : vector<16x64xf32>, vector<64x32xf32>, vector<16x32xf32> -> vector<16x32xf32>
    %c0_3 = arith.constant 0 : index
    %c0_4 = arith.constant 0 : index
    %3 = vector.load %arg3[%c0_3, %c0_4] : memref<1x32xf32, #tpu.memory_space<vmem>>, vector<1x32xf32>
    %4 = vector.broadcast %3 : vector<1x32xf32> to vector<16x32xf32>
    %5 = arith.addf %2, %4 : vector<16x32xf32>
    %c0_5 = arith.constant 0 : index
    %c0_6 = arith.constant 0 : index
    %6 = vector.load %arg4[%c0_5, %c0_6] : memref<16x32xf32, #tpu.memory_space<vmem>>, vector<16x32xf32>
    tpu.vector_store %arg4[%c0_5, %c0_6], %5 {strides = array<i32>} : memref<16x32xf32, #tpu.memory_space<vmem>>, vector<16x32xf32>,
    return
  }
  func.func @transform_0(%arg0: i32) -> (i32, i32) {
    %c0_i32 = arith.constant 0 : i32
    %c0_i32_0 = arith.constant 0 : i32
    return %arg0, %c0_i32 : i32, i32
  }
  func.func @transform_1(%arg0: i32) -> (i32, i32) {
    %c0_i32 = arith.constant 0 : i32
    %c0_i32_0 = arith.constant 0 : i32
    %c0_i32_1 = arith.constant 0 : i32
    return %c0_i32, %c0_i32_0 : i32, i32
  }
  func.func @transform_2(%arg0: i32) -> (i32, i32) {
    %c0_i32 = arith.constant 0 : i32
    %c0_i32_0 = arith.constant 0 : i32
    %c0_i32_1 = arith.constant 0 : i32
    return %c0_i32, %c0_i32_0 : i32, i32
  }
  func.func @transform_3(%arg0: i32) -> (i32, i32) {
    %c0_i32 = arith.constant 0 : i32
    %c0_i32_0 = arith.constant 0 : i32
    return %arg0, %c0_i32 : i32, i32
  }
}

module attributes {stable_mosaic.version = 11 : i64} {
  func.func @_linear_kernel(%arg0: i32, %arg1: memref<16x32xf32, #tpu.memory_space<vmem>>, %arg2: memref<32x64xf32, #tpu.memory_space<vmem>>, %arg3: memref<1x64xf32, #tpu.memory_space<vmem>>, %arg4: memref<16x64xf32, #tpu.memory_space<vmem>>) attributes {dimension_semantics = [#tpu.dimension_semantics<parallel>], iteration_bounds = array<i64: 1>, scalar_prefetch = 0 : i64, scratch_operands = 0 : i64, tpu.core_type = #tpu.core_type<tc>, window_params = [{transform_indices = @transform_0, window_bounds = array<i64: 16, 32>}, {pipeline_mode = #tpu.pipeline_mode<synchronous>, transform_indices = @transform_1, window_bounds = array<i64: 32, 64>}, {pipeline_mode = #tpu.pipeline_mode<synchronous>, transform_indices = @transform_2, window_bounds = array<i64: 1, 64>}, {transform_indices = @transform_3, window_bounds = array<i64: 16, 64>}]} {
    %c0 = arith.constant 0 : index
    %c0_0 = arith.constant 0 : index
    %0 = vector.load %arg1[%c0, %c0_0] : memref<16x32xf32, #tpu.memory_space<vmem>>, vector<16x32xf32>
    %c0_1 = arith.constant 0 : index
    %c0_2 = arith.constant 0 : index
    %1 = vector.load %arg2[%c0_1, %c0_2] : memref<32x64xf32, #tpu.memory_space<vmem>>, vector<32x64xf32>
    %cst = arith.constant dense<0.000000e+00> : vector<16x64xf32>
    %2 = tpu.matmul %0, %1, %cst {dimension_numbers = #tpu.dot_dimension_numbers<[1], [0], [0], [1], [0, 0, 1, 1], [], []>} : vector<16x32xf32>, vector<32x64xf32>, vector<16x64xf32> -> vector<16x64xf32>
    %c0_3 = arith.constant 0 : index
    %c0_4 = arith.constant 0 : index
    %3 = vector.load %arg3[%c0_3, %c0_4] : memref<1x64xf32, #tpu.memory_space<vmem>>, vector<1x64xf32>
    %4 = vector.broadcast %3 : vector<1x64xf32> to vector<16x64xf32>
    %5 = arith.addf %2, %4 : vector<16x64xf32>
    %c0_5 = arith.constant 0 : index
    %c0_6 = arith.constant 0 : index
    %6 = vector.load %arg4[%c0_5, %c0_6] : memref<16x64xf32, #tpu.memory_space<vmem>>, vector<16x64xf32>
    tpu.vector_store %arg4[%c0_5, %c0_6], %5 {strides = array<i32>} : memref<16x64xf32, #tpu.memory_space<vmem>>, vector<16x64xf32>,
    return
  }
  func.func @transform_0(%arg0: i32) -> (i32, i32) {
    %c0_i32 = arith.constant 0 : i32
    %c0_i32_0 = arith.constant 0 : i32
    return %arg0, %c0_i32 : i32, i32
  }
  func.func @transform_1(%arg0: i32) -> (i32, i32) {
    %c0_i32 = arith.constant 0 : i32
    %c0_i32_0 = arith.constant 0 : i32
    %c0_i32_1 = arith.constant 0 : i32
    return %c0_i32, %c0_i32_0 : i32, i32
  }
  func.func @transform_2(%arg0: i32) -> (i32, i32) {
    %c0_i32 = arith.constant 0 : i32
    %c0_i32_0 = arith.constant 0 : i32
    %c0_i32_1 = arith.constant 0 : i32
    return %c0_i32, %c0_i32_0 : i32, i32
  }
  func.func @transform_3(%arg0: i32) -> (i32, i32) {
    %c0_i32 = arith.constant 0 : i32
    %c0_i32_0 = arith.constant 0 : i32
    return %arg0, %c0_i32 : i32, i32
  }
}

</mosaic_0001>

<llo_original>
// kernel: project_in_out_forward.3
$region0: #{project_in_out_forward.3}
  #allocation0 [shape = 'u32[]', space=smem, size = 0x4, offset = 0x4, fixed_abs, tag = 'smem constant byte address 0x4 - core index']
  #allocation1 [shape = 'u32[144,128]{1,0:T(1,128)}', space=vmem, size = 0x12000, scoped, tag = 'internal scratch']
  %s0 = inlined_call_operand.vmem [shape: f32[16,64], index: 0, kind: input, shape index: {}]
  %s1 = inlined_call_operand.vmem [shape: f32[64,32], index: 1, kind: input, shape index: {}]
  %s2 = inlined_call_operand.vmem [shape: f32[1,32], index: 2, kind: input, shape index: {}]
  %s3 = inlined_call_operand.hbm [shape: f32[16,32], index: 3, kind: output, shape index: {}]
  %s4 = sld [smem:[#allocation0]]
  $region22: #{project_in_out_forward.3} parent=0
    _
  %s6 = ssub.s32 1, %s4
  %s7 = scalar_select 0, %s6, %s4
  $region1: #{project_in_out_forward.3} parent=0
    #allocation2 [shape = 'u8[8192]{0}', space=vmem, size = 0x2000, scoped, tag = 'output window, operand 0, single buffered']
    #allocation3 [shape = 's32[1]{0}', space=sflag, size = 0x4, scoped, tag = 'scoped memory for project_in_out_forward.3']
    %8 = vsyncpa [#allocation3], 0
    // Predicated region
    $region2: #{project_in_out_forward.3} parent=1 // pred_check
      _
    $region3: #{project_in_out_forward.3} parent=1 // pred_check_branch
      %10 = sbr.rel (0) target = $region5
    $region4: #{project_in_out_forward.3} parent=1 // pred_region
      _
    $region5: #{project_in_out_forward.3} parent=1 // pred_fallthru
      _
    // Predicated region
    $region6: #{project_in_out_forward.3} parent=1 // pred_check
      _
    $region7: #{project_in_out_forward.3} parent=1 // pred_check_branch
      %12 = sbr.rel (0) target = $region9
    $region8: #{project_in_out_forward.3} parent=1 // pred_region
      _
    $region9: #{project_in_out_forward.3} parent=1 // pred_fallthru
      _
    // Predicated region
    $region10: #{project_in_out_forward.3} parent=1 // pred_check
      _
    $region11: #{project_in_out_forward.3} parent=1 // pred_check_branch
      %14 = sbr.rel (0) target = $region13
    $region12: #{project_in_out_forward.3} parent=1 // pred_region
      _
    $region13: #{project_in_out_forward.3} parent=1 // pred_fallthru
      _
    %v15 = vld [vmem:[%s0] sm:$0xff]
    %v16 = vld [vmem:[%s0 + $0x8] sm:$0xff]
    %v17 = vld [vmem:[%s1] sm:$0xff]
    %v18 = vld [vmem:[%s1 + $0x8] sm:$0xff]
    %v19 = vld [vmem:[%s1 + $0x10] sm:$0xff]
    %v20 = vld [vmem:[%s1 + $0x18] sm:$0xff]
    %v21 = vld [vmem:[%s1 + $0x20] sm:$0xff]
    %v22 = vld [vmem:[%s1 + $0x28] sm:$0xff]
    %v23 = vld [vmem:[%s1 + $0x30] sm:$0xff]
    %v24 = vld [vmem:[%s1 + $0x38] sm:$0xff]
    %v25 = vld [vmem:[%s2] sm:$0x1]
    %v27 = vlaneseq
    %v28 = vshrl.u32 %v27, 7
    %v29 = vsub.s32 0, %v28
    %v30 = vrot.slane %v25, %v29
    %vm32 = vcmask 523264
    %v34 = vsel %vm32, %v15, 0
    %v37 = vsel %vm32, %v16, 0
    %39 = vmatprep.subr.mxu0 0.0
    %40 = vmatpush1.msra.mxu0 0.0
    %41 = vmatprep.subr.mxu0 0.0
    %42 = vmatpush1.msra.mxu0 0.0
    %43 = vmatprep.subr.mxu0 0.0
    %44 = vmatpush1.msra.mxu0 0.0
    %45 = vmatprep.subr.mxu0 0.0
    %46 = vmatpush1.msra.mxu0 0.0
    %47 = vmatprep.subr.mxu0 0.0
    %48 = vmatpush1.msra.mxu0 0.0
    %49 = vmatprep.subr.mxu0 0.0
    %50 = vmatpush1.msra.mxu0 0.0
    %51 = vmatprep.subr.mxu0 0.0
    %52 = vmatpush1.msra.mxu0 0.0
    %53 = vmatprep.subr.mxu0 0.0
    %54 = vmatpush1.msra.mxu0 0.0
    %55 = vmatprep.subr.mxu0 0.0
    %56 = vmatpush1.msra.mxu0 %v24
    %57 = vmatprep.subr.mxu0 0.0
    %58 = vmatpush1.msra.mxu0 %v23
    %59 = vmatprep.subr.mxu0 0.0
    %60 = vmatpush1.msra.mxu0 %v22
    %61 = vmatprep.subr.mxu0 0.0
    %62 = vmatpush1.msra.mxu0 %v21
    %63 = vmatprep.subr.mxu0 0.0
    %64 = vmatpush1.msra.mxu0 %v20
    %65 = vmatprep.subr.mxu0 0.0
    %66 = vmatpush1.msra.mxu0 %v19
    %67 = vmatprep.subr.mxu0 0.0
    %68 = vmatpush1.msra.mxu0 %v18
    %69 = vmatprep.subr.mxu0 0.0
    %70 = vmatpush1.msra.mxu0 %v17
    %71 = vmatprep.subr.mxu0 0.0
    %72 = vmatpush2.msra.mxu0 0.0
    %73 = vmatprep.subr.mxu0 0.0
    %74 = vmatpush2.msra.mxu0 0.0
    %75 = vmatprep.subr.mxu0 0.0
    %76 = vmatpush2.msra.mxu0 0.0
    %77 = vmatprep.subr.mxu0 0.0
    %78 = vmatpush2.msra.mxu0 0.0
    %79 = vmatprep.subr.mxu0 0.0
    %80 = vmatpush2.msra.mxu0 0.0
    %81 = vmatprep.subr.mxu0 0.0
    %82 = vmatpush2.msra.mxu0 0.0
    %83 = vmatprep.subr.mxu0 0.0
    %84 = vmatpush2.msra.mxu0 0.0
    %85 = vmatprep.subr.mxu0 0.0
    %86 = vmatpush2.msra.mxu0 0.0
    %87 = vmatprep.subr.mxu0 0.0
    %88 = vmatpush2.msra.mxu0 0.0
    %89 = vmatprep.subr.mxu0 0.0
    %90 = vmatpush2.msra.mxu0 0.0
    %91 = vmatprep.subr.mxu0 0.0
    %92 = vmatpush2.msra.mxu0 0.0
    %93 = vmatprep.subr.mxu0 0.0
    %94 = vmatpush2.msra.mxu0 0.0
    %95 = vmatprep.subr.mxu0 0.0
    %96 = vmatpush2.msra.mxu0 0.0
    %97 = vmatprep.subr.mxu0 0.0
    %98 = vmatpush2.msra.mxu0 0.0
    %99 = vmatprep.subr.mxu0 0.0
    %100 = vmatpush2.msra.mxu0 0.0
    %101 = vmatprep.subr.mxu0 0.0
    %102 = vmatpush2.msra.mxu0 0.0
    %103 = vmatprep.mubr.f32.mxu0 0.0
    %104 = vmatmul.mubr.f32.gmra.mxu0 %v34
    %v105 = vpop.f32.mrf.mxu0
    %v106 = vadd.f32 %v30, %v105
    %v107 = vpop.f32.mrf.mxu0
    %108 = vmatprep.mubr.f32.mxu0 0.0
    %109 = vmatmul.mubr.f32.gmra.mxu0 %v37
    %v110 = vpop.f32.mrf.mxu0
    %v111 = vadd.f32 %v30, %v110
    %v112 = vpop.f32.mrf.mxu0
    %113 = vdwg.mxu0
    %vm114 = vcmask 261120
    %115 = vst.msk [vmem:[#allocation2] sm:$0xff] %vm114, %v106
    %116 = vst.msk [vmem:[#allocation2 + $0x8] sm:$0xff] %vm114, %v111
    // Predicated region
    $region14: #{project_in_out_forward.3} parent=1 // pred_check
      _
    $region15: #{project_in_out_forward.3} parent=1 // pred_check_branch
      %118 = sbr.rel (0) target = $region17
    $region16: #{project_in_out_forward.3} parent=1 // pred_region
      %s120 = ssub.s32 256, 256
      %121 = vsyncadd [#allocation3], %s120
      %s122 = sshll.u32 [#allocation2], 4
      %s123 = int_to_ptr.vmem [resolvable:$true] %s122
      %128 = dma.vmem_to_hbm [thread:$0]  %s123, 256, %s3, [#allocation3], 128, 128, 8
    $region17: #{project_in_out_forward.3} parent=1 // pred_fallthru
      _
    // Predicated region
    $region18: #{project_in_out_forward.3} parent=1 // pred_check
      _
    $region19: #{project_in_out_forward.3} parent=1 // pred_check_branch
      %130 = sbr.rel (0) target = $region21
    $region20: #{project_in_out_forward.3} parent=1 // pred_region
      %131 = dma.done [#allocation3], 256
    $region21: #{project_in_out_forward.3} parent=1 // pred_fallthru
      _
    %132 = vsyncpa [#allocation3], 1

// kernel: project_in_out_forward.2
$region0: #{project_in_out_forward.2}
  #allocation0 [shape = 'u32[]', space=smem, size = 0x4, offset = 0x4, fixed_abs, tag = 'smem constant byte address 0x4 - core index']
  #allocation1 [shape = 'u32[144,128]{1,0:T(1,128)}', space=vmem, size = 0x12000, scoped, tag = 'internal scratch']
  %s0 = inlined_call_operand.hbm [shape: f32[16,32], index: 0, kind: input, shape index: {}]
  %s1 = inlined_call_operand.hbm [shape: f32[32,64], index: 1, kind: input, shape index: {}]
  %s2 = inlined_call_operand.vmem [shape: f32[1,64], index: 2, kind: input, shape index: {}]
  %s3 = inlined_call_operand.vmem [shape: f32[16,64], index: 3, kind: output, shape index: {}]
  %s4 = sld [smem:[#allocation0]]
  $region30: #{project_in_out_forward.2} parent=0
    _
  %s6 = ssub.s32 1, %s4
  %s7 = scalar_select 0, %s6, %s4
  $region1: #{project_in_out_forward.2} parent=0
    #allocation2 [shape = 'u8[8192]{0}', space=vmem, size = 0x2000, scoped, tag = 'input window, operand 0, single buffered']
    #allocation3 [shape = 's32[1]{0}', space=sflag, size = 0x4, scoped, tag = 'scoped memory for project_in_out_forward.2']
    #allocation4 [shape = 'u8[16384]{0}', space=vmem, size = 0x4000, scoped, tag = 'input window, operand 1, single buffered']
    #allocation5 [shape = 's32[1]{0}', space=sflag, size = 0x4, scoped, tag = 'scoped memory for project_in_out_forward.2']
    %8 = vsyncpa [#allocation3], 0
    %9 = vsyncpa [#allocation5], 0
    // Predicated region
    $region2: #{project_in_out_forward.2} parent=1 // pred_check
      _
    $region3: #{project_in_out_forward.2} parent=1 // pred_check_branch
      %11 = sbr.rel (0) target = $region5
    $region4: #{project_in_out_forward.2} parent=1 // pred_region
      %s13 = ssub.s32 256, 256
      %14 = vsyncadd [#allocation3], %s13
      %s15 = sshll.u32 [#allocation2], 4
      %s16 = int_to_ptr.vmem [resolvable:$true] %s15
      %21 = dma.hbm_to_vmem [thread:$0]  %s0, 256, %s16, [#allocation3], 128, 128, 8
    $region5: #{project_in_out_forward.2} parent=1 // pred_fallthru
      _
    // Predicated region
    $region6: #{project_in_out_forward.2} parent=1 // pred_check
      _
    $region7: #{project_in_out_forward.2} parent=1 // pred_check_branch
      %23 = sbr.rel (0) target = $region9
    $region8: #{project_in_out_forward.2} parent=1 // pred_region
      %s25 = ssub.s32 512, 512
      %26 = vsyncadd [#allocation5], %s25
      %s27 = sshll.u32 [#allocation4], 4
      %s28 = int_to_ptr.vmem [resolvable:$true] %s27
      %33 = dma.hbm_to_vmem [thread:$0]  %s1, 512, %s28, [#allocation5], 128, 128, 8
    $region9: #{project_in_out_forward.2} parent=1 // pred_fallthru
      _
    // Predicated region
    $region10: #{project_in_out_forward.2} parent=1 // pred_check
      _
    $region11: #{project_in_out_forward.2} parent=1 // pred_check_branch
      %35 = sbr.rel (0) target = $region13
    $region12: #{project_in_out_forward.2} parent=1 // pred_region
      _
    $region13: #{project_in_out_forward.2} parent=1 // pred_fallthru
      _
    // Predicated region
    $region14: #{project_in_out_forward.2} parent=1 // pred_check
      _
    $region15: #{project_in_out_forward.2} parent=1 // pred_check_branch
      %37 = sbr.rel (0) target = $region17
    $region16: #{project_in_out_forward.2} parent=1 // pred_region
      %38 = dma.done [#allocation3], 256
    $region17: #{project_in_out_forward.2} parent=1 // pred_fallthru
      _
    // Predicated region
    $region18: #{project_in_out_forward.2} parent=1 // pred_check
      _
    $region19: #{project_in_out_forward.2} parent=1 // pred_check_branch
      %40 = sbr.rel (0) target = $region21
    $region20: #{project_in_out_forward.2} parent=1 // pred_region
      %41 = dma.done [#allocation5], 512
    $region21: #{project_in_out_forward.2} parent=1 // pred_fallthru
      _
    %v42 = vld [vmem:[#allocation2] sm:$0xff]
    %v43 = vld [vmem:[#allocation2 + $0x8] sm:$0xff]
    %v44 = vld [vmem:[#allocation4] sm:$0xff]
    %v45 = vld [vmem:[#allocation4 + $0x8] sm:$0xff]
    %v46 = vld [vmem:[#allocation4 + $0x10] sm:$0xff]
    %v47 = vld [vmem:[#allocation4 + $0x18] sm:$0xff]
    %v48 = vld [vmem:[%s2] sm:$0x1]
    %v50 = vlaneseq
    %v51 = vshrl.u32 %v50, 7
    %v52 = vsub.s32 0, %v51
    %v53 = vrot.slane %v48, %v52
    %vm55 = vcmask 261120
    %v57 = vsel %vm55, %v42, 0
    %v60 = vsel %vm55, %v43, 0
    %62 = vmatprep.subr.mxu0 0.0
    %63 = vmatpush1.msra.mxu0 0.0
    %64 = vmatprep.subr.mxu0 0.0
    %65 = vmatpush1.msra.mxu0 0.0
    %66 = vmatprep.subr.mxu0 0.0
    %67 = vmatpush1.msra.mxu0 0.0
    %68 = vmatprep.subr.mxu0 0.0
    %69 = vmatpush1.msra.mxu0 0.0
    %70 = vmatprep.subr.mxu0 0.0
    %71 = vmatpush1.msra.mxu0 0.0
    %72 = vmatprep.subr.mxu0 0.0
    %73 = vmatpush1.msra.mxu0 0.0
    %74 = vmatprep.subr.mxu0 0.0
    %75 = vmatpush1.msra.mxu0 0.0
    %76 = vmatprep.subr.mxu0 0.0
    %77 = vmatpush1.msra.mxu0 0.0
    %78 = vmatprep.subr.mxu0 0.0
    %79 = vmatpush1.msra.mxu0 0.0
    %80 = vmatprep.subr.mxu0 0.0
    %81 = vmatpush1.msra.mxu0 0.0
    %82 = vmatprep.subr.mxu0 0.0
    %83 = vmatpush1.msra.mxu0 0.0
    %84 = vmatprep.subr.mxu0 0.0
    %85 = vmatpush1.msra.mxu0 0.0
    %86 = vmatprep.subr.mxu0 0.0
    %87 = vmatpush1.msra.mxu0 %v47
    %88 = vmatprep.subr.mxu0 0.0
    %89 = vmatpush1.msra.mxu0 %v46
    %90 = vmatprep.subr.mxu0 0.0
    %91 = vmatpush1.msra.mxu0 %v45
    %92 = vmatprep.subr.mxu0 0.0
    %93 = vmatpush1.msra.mxu0 %v44
    %94 = vmatprep.subr.mxu0 0.0
    %95 = vmatpush2.msra.mxu0 0.0
    %96 = vmatprep.subr.mxu0 0.0
    %97 = vmatpush2.msra.mxu0 0.0
    %98 = vmatprep.subr.mxu0 0.0
    %99 = vmatpush2.msra.mxu0 0.0
    %100 = vmatprep.subr.mxu0 0.0
    %101 = vmatpush2.msra.mxu0 0.0
    %102 = vmatprep.subr.mxu0 0.0
    %103 = vmatpush2.msra.mxu0 0.0
    %104 = vmatprep.subr.mxu0 0.0
    %105 = vmatpush2.msra.mxu0 0.0
    %106 = vmatprep.subr.mxu0 0.0
    %107 = vmatpush2.msra.mxu0 0.0
    %108 = vmatprep.subr.mxu0 0.0
    %109 = vmatpush2.msra.mxu0 0.0
    %110 = vmatprep.subr.mxu0 0.0
    %111 = vmatpush2.msra.mxu0 0.0
    %112 = vmatprep.subr.mxu0 0.0
    %113 = vmatpush2.msra.mxu0 0.0
    %114 = vmatprep.subr.mxu0 0.0
    %115 = vmatpush2.msra.mxu0 0.0
    %116 = vmatprep.subr.mxu0 0.0
    %117 = vmatpush2.msra.mxu0 0.0
    %118 = vmatprep.subr.mxu0 0.0
    %119 = vmatpush2.msra.mxu0 0.0
    %120 = vmatprep.subr.mxu0 0.0
    %121 = vmatpush2.msra.mxu0 0.0
    %122 = vmatprep.subr.mxu0 0.0
    %123 = vmatpush2.msra.mxu0 0.0
    %124 = vmatprep.subr.mxu0 0.0
    %125 = vmatpush2.msra.mxu0 0.0
    %126 = vmatprep.mubr.f32.mxu0 0.0
    %127 = vmatmul.mubr.f32.gmra.mxu0 %v57
    %v128 = vpop.f32.mrf.mxu0
    %v129 = vadd.f32 %v53, %v128
    %v130 = vpop.f32.mrf.mxu0
    %131 = vmatprep.mubr.f32.mxu0 0.0
    %132 = vmatmul.mubr.f32.gmra.mxu0 %v60
    %v133 = vpop.f32.mrf.mxu0
    %v134 = vadd.f32 %v53, %v133
    %v135 = vpop.f32.mrf.mxu0
    %136 = vdwg.mxu0
    %vm137 = vcmask 523264
    %138 = vst.msk [vmem:[%s3] sm:$0xff] %vm137, %v129
    %139 = vst.msk [vmem:[%s3 + $0x8] sm:$0xff] %vm137, %v134
    // Predicated region
    $region22: #{project_in_out_forward.2} parent=1 // pred_check
      _
    $region23: #{project_in_out_forward.2} parent=1 // pred_check_branch
      %141 = sbr.rel (0) target = $region25
    $region24: #{project_in_out_forward.2} parent=1 // pred_region
      _
    $region25: #{project_in_out_forward.2} parent=1 // pred_fallthru
      _
    // Predicated region
    $region26: #{project_in_out_forward.2} parent=1 // pred_check
      _
    $region27: #{project_in_out_forward.2} parent=1 // pred_check_branch
      %143 = sbr.rel (0) target = $region29
    $region28: #{project_in_out_forward.2} parent=1 // pred_region
      _
    $region29: #{project_in_out_forward.2} parent=1 // pred_fallthru
      _
    %144 = vsyncpa [#allocation3], 1
    %145 = vsyncpa [#allocation5], 1

</llo_original>
